<compile_context>
chip_gen: v7x
topology: tpu7x:2x2x1
jax: 0.10.0
libtpu: 0.0.40
codegen_flags: <defaults>
</compile_context>

<pallas_src>
import jax
import jax.numpy as jnp
from jax.experimental import pallas as pl
from jax.experimental.pallas import tpu as pltpu


NUM_CHANNELS = 12
NUM_KERNELS = 6
KERNEL_SIZE = 5
IN_DIM = 7
HID1 = 64
HID2 = 128
KOUT = NUM_CHANNELS * NUM_KERNELS * KERNEL_SIZE   # 360
BOUT = NUM_KERNELS                                # 6
BIAS_OFF = 384                                    # lane-tile-aligned start of bias head
HEAD_PAD = 512                                    # 4 x 128 lanes
MAX_TM = 2048                                     # max batch-tile rows (fits v5e scoped VMEM)
MIN_STEPS = 2                                     # keep both v7x TensorCores busy when possible


def _gelu_exact(x):
    # PyTorch nn.GELU() default (approximate='none'): 0.5*x*(1+erf(x/sqrt(2)))
    return 0.5 * x * (1.0 + jax.lax.erf(x * 0.7071067811865476))


def _adapt_kernel_body(x_ref, w1_ref, b1_ref, w2_ref, b2_ref, wh_ref, bh_ref,
                       kern_ref, bias_ref):
    # intermediate_net: Linear(7,64) -> GELU -> Linear(64,128)
    x = x_ref[...].astype(jnp.bfloat16)                                 # (TM, 7)
    h1 = jnp.dot(x, w1_ref[...], preferred_element_type=jnp.float32) + b1_ref[...]
    h1 = _gelu_exact(h1)
    inter = (jnp.dot(h1.astype(jnp.bfloat16), w2_ref[...],
                     preferred_element_type=jnp.float32) + b2_ref[...])

    # shared GELU feeding the fused (kernel_net ++ bias_net) head
    g = _gelu_exact(inter).astype(jnp.bfloat16)
    head = (jnp.dot(g, wh_ref[...], preferred_element_type=jnp.float32)
            + bh_ref[...])                                              # (TM, 512) f32

    kern_ref[...] = head[:, :KOUT]                        # lanes 0:360 (aligned start)
    bias_ref[...] = head[:, BIAS_OFF:BIAS_OFF + BOUT]     # lanes 384:390 (tile aligned)


def _cdiv(a, b):
    return -(-a // b)


def _round_up(n, m):
    return _cdiv(n, m) * m


@jax.jit
def adapt_kernel_forward(flattened_pose, params):
    """AdaptKernel forward pass via a single fused Pallas TPU kernel."""
    w1, b1, w2, b2, wk, bk, wb, bb = params
    b = flattened_pose.shape[0]

    # --- parameter prep (layout only, outside the kernel; tiny, one-time) ----
    w1_bf = w1.astype(jnp.bfloat16)
    w2_bf = w2.astype(jnp.bfloat16)
    wh = jnp.zeros((HID2, HEAD_PAD), jnp.bfloat16)
    wh = wh.at[:, :KOUT].set(wk.astype(jnp.bfloat16))
    wh = wh.at[:, BIAS_OFF:BIAS_OFF + BOUT].set(wb.astype(jnp.bfloat16))
    bh = jnp.zeros((1, HEAD_PAD), jnp.float32)
    bh = bh.at[:, :KOUT].set(bk)
    bh = bh.at[:, BIAS_OFF:BIAS_OFF + BOUT].set(bb)

    # --- batch tiling: >=2 grid steps when possible, no row padding ----------
    n_steps = max(MIN_STEPS, _cdiv(b, MAX_TM))
    tm = min(MAX_TM, max(8, _round_up(_cdiv(b, n_steps), 8)))
    grid = (_cdiv(b, tm),)                 # partial last block handled by Pallas

    flops = 2 * b * (IN_DIM * HID1 + HID1 * HID2 + HID2 * HEAD_PAD)
    bytes_accessed = (b * 4 * (IN_DIM + KOUT + BOUT)
                      + 2 * (IN_DIM * HID1 + HID1 * HID2 + HID2 * HEAD_PAD)
                      + 4 * (HID1 + HID2 + 2 * HEAD_PAD))

    kern, bias = pl.pallas_call(
        _adapt_kernel_body,
        out_shape=(jax.ShapeDtypeStruct((b, KOUT), jnp.float32),
                   jax.ShapeDtypeStruct((b, BOUT), jnp.float32)),
        grid_spec=pltpu.PrefetchScalarGridSpec(
            num_scalar_prefetch=0,
            grid=grid,
            in_specs=[
                pl.BlockSpec((tm, IN_DIM), lambda i: (i, 0)),        # pose tile
                pl.BlockSpec((IN_DIM, HID1), lambda i: (0, 0)),      # w1 (resident, bf16)
                pl.BlockSpec((1, HID1), lambda i: (0, 0)),           # b1
                pl.BlockSpec((HID1, HID2), lambda i: (0, 0)),        # w2 (bf16)
                pl.BlockSpec((1, HID2), lambda i: (0, 0)),           # b2
                pl.BlockSpec((HID2, HEAD_PAD), lambda i: (0, 0)),    # fused head W (bf16)
                pl.BlockSpec((1, HEAD_PAD), lambda i: (0, 0)),       # fused head b (f32)
            ],
            out_specs=(pl.BlockSpec((tm, KOUT), lambda i: (i, 0)),   # conv kernels
                       pl.BlockSpec((tm, BOUT), lambda i: (i, 0))),  # biases
        ),
        compiler_params=pltpu.CompilerParams(
            dimension_semantics=("parallel",)),
        cost_estimate=pl.CostEstimate(flops=flops,
                                      transcendentals=b * (HID1 + HID2),
                                      bytes_accessed=bytes_accessed),
    )(flattened_pose.astype(jnp.float32), w1_bf, b1, w2_bf, b2, wh, bh)

    # Contiguous (b, 360) -> (b, 6, 12, 5): metadata-only reshape, no slicing.
    conv_kernels = kern.reshape(b, NUM_KERNELS, NUM_CHANNELS, KERNEL_SIZE)
    return conv_kernels, bias


def init_params(key):
    """Deterministic synthetic parameters. Weights stored as (in, out)."""
    ks = jax.random.split(key, 8)

    def linear(kw, kb, fan_in, fan_out):
        bound = 1.0 / jnp.sqrt(fan_in)
        w = jax.random.uniform(kw, (fan_in, fan_out), jnp.float32, -bound, bound)
        bias = jax.random.uniform(kb, (1, fan_out), jnp.float32, -bound, bound)
        return w, bias

    w1, b1 = linear(ks[0], ks[1], IN_DIM, HID1)
    w2, b2 = linear(ks[2], ks[3], HID1, HID2)
    wk, bk = linear(ks[4], ks[5], HID2, KOUT)
    wb, bb = linear(ks[6], ks[7], HID2, BOUT)
    return (w1, b1, w2, b2, wk, bk, wb, bb)


def reference_forward(flattened_pose, params):
    """Pure-JAX f32 reference mirroring the PyTorch module."""
    w1, b1, w2, b2, wk, bk, wb, bb = params
    hp = jax.lax.Precision.HIGHEST
    h1 = _gelu_exact(jnp.dot(flattened_pose, w1, precision=hp) + b1)
    inter = jnp.dot(h1, w2, precision=hp) + b2
    g = _gelu_exact(inter)
    k = (jnp.dot(g, wk, precision=hp) + bk).reshape(
        -1, NUM_KERNELS, NUM_CHANNELS, KERNEL_SIZE)
    bias = jnp.dot(g, wb, precision=hp) + bb
    return k, bias


if __name__ == "__main__":
    key = jax.random.PRNGKey(0)
    pkey, xkey = jax.random.split(key)

    params = init_params(pkey)
    batch = 8
    flattened_pose = jax.random.normal(xkey, (batch, IN_DIM), jnp.float32)

    conv_kernels, biases = adapt_kernel_forward(flattened_pose, params)
    jax.block_until_ready((conv_kernels, biases))

    ref_k, ref_b = reference_forward(flattened_pose, params)
    assert conv_kernels.shape == (batch, NUM_KERNELS, NUM_CHANNELS, KERNEL_SIZE)
    assert biases.shape == (batch, NUM_KERNELS)
    # Kernel matmuls are single-pass bf16 with f32 accumulation, so compare
    # against the f32 reference with a tolerance covering bf16 quantization.
    assert jnp.allclose(conv_kernels, ref_k, atol=2e-2, rtol=2e-2), \
        float(jnp.max(jnp.abs(conv_kernels - ref_k)))
    assert jnp.allclose(biases, ref_b, atol=2e-2, rtol=2e-2), \
        float(jnp.max(jnp.abs(biases - ref_b)))

    print("KERNEL_OK")
</pallas_src>

<mosaic_0001>
module attributes {stable_mosaic.version = 11 : i64} {
  func.func @_adapt_kernel_body(%arg0: i32, %arg1: memref<8x7xf32, #tpu.memory_space<vmem>>, %arg2: memref<7x64xbf16, #tpu.memory_space<vmem>>, %arg3: memref<1x64xf32, #tpu.memory_space<vmem>>, %arg4: memref<64x128xbf16, #tpu.memory_space<vmem>>, %arg5: memref<1x128xf32, #tpu.memory_space<vmem>>, %arg6: memref<128x512xbf16, #tpu.memory_space<vmem>>, %arg7: memref<1x512xf32, #tpu.memory_space<vmem>>, %arg8: memref<8x360xf32, #tpu.memory_space<vmem>>, %arg9: memref<8x6xf32, #tpu.memory_space<vmem>>) attributes {dimension_semantics = [#tpu.dimension_semantics<parallel>], iteration_bounds = array<i64: 1>, scalar_prefetch = 0 : i64, scratch_operands = 0 : i64, tpu.core_type = #tpu.core_type<tc>, window_params = [{transform_indices = @transform_0, window_bounds = array<i64: 8, 7>}, {pipeline_mode = #tpu.pipeline_mode<synchronous>, transform_indices = @transform_1, window_bounds = array<i64: 7, 64>}, {pipeline_mode = #tpu.pipeline_mode<synchronous>, transform_indices = @transform_2, window_bounds = array<i64: 1, 64>}, {pipeline_mode = #tpu.pipeline_mode<synchronous>, transform_indices = @transform_3, window_bounds = array<i64: 64, 128>}, {pipeline_mode = #tpu.pipeline_mode<synchronous>, transform_indices = @transform_4, window_bounds = array<i64: 1, 128>}, {pipeline_mode = #tpu.pipeline_mode<synchronous>, transform_indices = @transform_5, window_bounds = array<i64: 128, 512>}, {pipeline_mode = #tpu.pipeline_mode<synchronous>, transform_indices = @transform_6, window_bounds = array<i64: 1, 512>}, {transform_indices = @transform_7, window_bounds = array<i64: 8, 360>}, {transform_indices = @transform_8, window_bounds = array<i64: 8, 6>}]} {
    %c0 = arith.constant 0 : index
    %c0_0 = arith.constant 0 : index
    %0 = vector.load %arg1[%c0, %c0_0] : memref<8x7xf32, #tpu.memory_space<vmem>>, vector<8x7xf32>
    %1 = arith.truncf %0 : vector<8x7xf32> to vector<8x7xbf16>
    %c0_1 = arith.constant 0 : index
    %c0_2 = arith.constant 0 : index
    %2 = vector.load %arg2[%c0_1, %c0_2] : memref<7x64xbf16, #tpu.memory_space<vmem>>, vector<7x64xbf16>
    %cst = arith.constant dense<0.000000e+00> : vector<8x64xf32>
    %3 = tpu.matmul %1, %2, %cst {dimension_numbers = #tpu.dot_dimension_numbers<[1], [0], [0], [1], [0, 0, 1, 1], [], []>} : vector<8x7xbf16>, vector<7x64xbf16>, vector<8x64xf32> -> vector<8x64xf32>
    %c0_3 = arith.constant 0 : index
    %c0_4 = arith.constant 0 : index
    %4 = vector.load %arg3[%c0_3, %c0_4] : memref<1x64xf32, #tpu.memory_space<vmem>>, vector<1x64xf32>
    %5 = vector.broadcast %4 : vector<1x64xf32> to vector<8x64xf32>
    %6 = arith.addf %3, %5 : vector<8x64xf32>
    %cst_5 = arith.constant 5.000000e-01 : f32
    %7 = vector.broadcast %cst_5 : f32 to vector<8x64xf32>
    %8 = arith.mulf %7, %6 : vector<8x64xf32>
    %cst_6 = arith.constant 0.707106769 : f32
    %9 = vector.broadcast %cst_6 : f32 to vector<8x64xf32>
    %10 = arith.mulf %6, %9 : vector<8x64xf32>
    %11 = math.erf %10 : vector<8x64xf32>
    %cst_7 = arith.constant 1.000000e+00 : f32
    %12 = vector.broadcast %cst_7 : f32 to vector<8x64xf32>
    %13 = arith.addf %12, %11 : vector<8x64xf32>
    %14 = arith.mulf %8, %13 : vector<8x64xf32>
    %15 = arith.truncf %14 : vector<8x64xf32> to vector<8x64xbf16>
    %c0_8 = arith.constant 0 : index
    %c0_9 = arith.constant 0 : index
    %16 = vector.load %arg4[%c0_8, %c0_9] : memref<64x128xbf16, #tpu.memory_space<vmem>>, vector<64x128xbf16>
    %cst_10 = arith.constant dense<0.000000e+00> : vector<8x128xf32>
    %17 = tpu.matmul %15, %16, %cst_10 {dimension_numbers = #tpu.dot_dimension_numbers<[1], [0], [0], [1], [0, 0, 1, 1], [], []>} : vector<8x64xbf16>, vector<64x128xbf16>, vector<8x128xf32> -> vector<8x128xf32>
    %c0_11 = arith.constant 0 : index
    %c0_12 = arith.constant 0 : index
    %18 = vector.load %arg5[%c0_11, %c0_12] : memref<1x128xf32, #tpu.memory_space<vmem>>, vector<1x128xf32>
    %19 = vector.broadcast %18 : vector<1x128xf32> to vector<8x128xf32>
    %20 = arith.addf %17, %19 : vector<8x128xf32>
    %cst_13 = arith.constant 5.000000e-01 : f32
    %21 = vector.broadcast %cst_13 : f32 to vector<8x128xf32>
    %22 = arith.mulf %21, %20 : vector<8x128xf32>
    %cst_14 = arith.constant 0.707106769 : f32
    %23 = vector.broadcast %cst_14 : f32 to vector<8x128xf32>
    %24 = arith.mulf %20, %23 : vector<8x128xf32>
    %25 = math.erf %24 : vector<8x128xf32>
    %cst_15 = arith.constant 1.000000e+00 : f32
    %26 = vector.broadcast %cst_15 : f32 to vector<8x128xf32>
    %27 = arith.addf %26, %25 : vector<8x128xf32>
    %28 = arith.mulf %22, %27 : vector<8x128xf32>
    %29 = arith.truncf %28 : vector<8x128xf32> to vector<8x128xbf16>
    %c0_16 = arith.constant 0 : index
    %c0_17 = arith.constant 0 : index
    %30 = vector.load %arg6[%c0_16, %c0_17] : memref<128x512xbf16, #tpu.memory_space<vmem>>, vector<128x512xbf16>
    %cst_18 = arith.constant dense<0.000000e+00> : vector<8x512xf32>
    %31 = tpu.matmul %29, %30, %cst_18 {dimension_numbers = #tpu.dot_dimension_numbers<[1], [0], [0], [1], [0, 0, 1, 1], [], []>} : vector<8x128xbf16>, vector<128x512xbf16>, vector<8x512xf32> -> vector<8x512xf32>
    %c0_19 = arith.constant 0 : index
    %c0_20 = arith.constant 0 : index
    %32 = vector.load %arg7[%c0_19, %c0_20] : memref<1x512xf32, #tpu.memory_space<vmem>>, vector<1x512xf32>
    %33 = vector.broadcast %32 : vector<1x512xf32> to vector<8x512xf32>
    %34 = arith.addf %31, %33 : vector<8x512xf32>
    %35 = vector.extract_strided_slice %34 {offsets = [0, 0], sizes = [8, 360], strides = [1, 1]} : vector<8x512xf32> to vector<8x360xf32>
    %c0_21 = arith.constant 0 : index
    %c0_22 = arith.constant 0 : index
    %36 = vector.load %arg8[%c0_21, %c0_22] : memref<8x360xf32, #tpu.memory_space<vmem>>, vector<8x360xf32>
    tpu.vector_store %arg8[%c0_21, %c0_22], %35 {strides = array<i32>} : memref<8x360xf32, #tpu.memory_space<vmem>>, vector<8x360xf32>,
    %37 = vector.extract_strided_slice %34 {offsets = [0, 384], sizes = [8, 6], strides = [1, 1]} : vector<8x512xf32> to vector<8x6xf32>
    %c0_23 = arith.constant 0 : index
    %c0_24 = arith.constant 0 : index
    %38 = vector.load %arg9[%c0_23, %c0_24] : memref<8x6xf32, #tpu.memory_space<vmem>>, vector<8x6xf32>
    tpu.vector_store %arg9[%c0_23, %c0_24], %37 {strides = array<i32>} : memref<8x6xf32, #tpu.memory_space<vmem>>, vector<8x6xf32>,
    return
  }
  func.func @transform_0(%arg0: i32) -> (i32, i32) {
    %c0_i32 = arith.constant 0 : i32
    %c0_i32_0 = arith.constant 0 : i32
    return %arg0, %c0_i32 : i32, i32
  }
  func.func @transform_1(%arg0: i32) -> (i32, i32) {
    %c0_i32 = arith.constant 0 : i32
    %c0_i32_0 = arith.constant 0 : i32
    %c0_i32_1 = arith.constant 0 : i32
    return %c0_i32, %c0_i32_0 : i32, i32
  }
  func.func @transform_2(%arg0: i32) -> (i32, i32) {
    %c0_i32 = arith.constant 0 : i32
    %c0_i32_0 = arith.constant 0 : i32
    %c0_i32_1 = arith.constant 0 : i32
    return %c0_i32, %c0_i32_0 : i32, i32
  }
  func.func @transform_3(%arg0: i32) -> (i32, i32) {
    %c0_i32 = arith.constant 0 : i32
    %c0_i32_0 = arith.constant 0 : i32
    %c0_i32_1 = arith.constant 0 : i32
    return %c0_i32, %c0_i32_0 : i32, i32
  }
  func.func @transform_4(%arg0: i32) -> (i32, i32) {
    %c0_i32 = arith.constant 0 : i32
    %c0_i32_0 = arith.constant 0 : i32
    %c0_i32_1 = arith.constant 0 : i32
    return %c0_i32, %c0_i32_0 : i32, i32
  }
  func.func @transform_5(%arg0: i32) -> (i32, i32) {
    %c0_i32 = arith.constant 0 : i32
    %c0_i32_0 = arith.constant 0 : i32
    %c0_i32_1 = arith.constant 0 : i32
    return %c0_i32, %c0_i32_0 : i32, i32
  }
  func.func @transform_6(%arg0: i32) -> (i32, i32) {
    %c0_i32 = arith.constant 0 : i32
    %c0_i32_0 = arith.constant 0 : i32
    %c0_i32_1 = arith.constant 0 : i32
    return %c0_i32, %c0_i32_0 : i32, i32
  }
  func.func @transform_7(%arg0: i32) -> (i32, i32) {
    %c0_i32 = arith.constant 0 : i32
    %c0_i32_0 = arith.constant 0 : i32
    return %arg0, %c0_i32 : i32, i32
  }
  func.func @transform_8(%arg0: i32) -> (i32, i32) {
    %c0_i32 = arith.constant 0 : i32
    %c0_i32_0 = arith.constant 0 : i32
    return %arg0, %c0_i32 : i32, i32
  }
}

</mosaic_0001>

<llo_original>
// kernel: adapt_kernel_forward.1
$region0: #{adapt_kernel_forward.1}
  #allocation0 [shape = 'u32[]', space=smem, size = 0x4, offset = 0x4, fixed_abs, tag = 'smem constant byte address 0x4 - core index']
  #allocation1 [shape = 'u32[144,128]{1,0:T(1,128)}', space=vmem, size = 0x12000, scoped, tag = 'internal scratch']
  %s0 = inlined_call_operand.vmem [shape: f32[8,7], index: 0, kind: input, shape index: {}]
  %s1 = inlined_call_operand.vmem [shape: bf16[7,64], index: 1, kind: input, shape index: {}]
  %s2 = inlined_call_operand.vmem [shape: f32[1,64], index: 2, kind: input, shape index: {}]
  %s3 = inlined_call_operand.vmem [shape: bf16[64,128], index: 3, kind: input, shape index: {}]
  %s4 = inlined_call_operand.vmem [shape: f32[1,128], index: 4, kind: input, shape index: {}]
  %s5 = inlined_call_operand.vmem [shape: bf16[128,512], index: 5, kind: input, shape index: {}]
  %s6 = inlined_call_operand.vmem [shape: f32[1,512], index: 6, kind: input, shape index: {}]
  %s7 = inlined_call_operand.vmem [shape: f32[8,360], index: 7, kind: output, shape index: {0}]
  %s8 = inlined_call_operand.hbm [shape: f32[8,6], index: 8, kind: output, shape index: {1}]
  %9 = xla_tuple %s7, %s8
  %s10 = sld [smem:[#allocation0]]
  $region46: #{adapt_kernel_forward.1} parent=0
    _
  %s12 = ssub.s32 1, %s10
  %s13 = scalar_select 0, %s12, %s10
  $region1: #{adapt_kernel_forward.1} parent=0
    #allocation2 [shape = 'u8[4096]{0}', space=vmem, size = 0x1000, scoped, tag = 'output window, operand 1, single buffered']
    #allocation3 [shape = 's32[1]{0}', space=sflag, size = 0x4, scoped, tag = 'scoped memory for adapt_kernel_forward.1']
    %14 = vsyncpa [#allocation3], 0
    // Predicated region
    $region2: #{adapt_kernel_forward.1} parent=1 // pred_check
      _
    $region3: #{adapt_kernel_forward.1} parent=1 // pred_check_branch
      %16 = sbr.rel (0) target = $region5
    $region4: #{adapt_kernel_forward.1} parent=1 // pred_region
      _
    $region5: #{adapt_kernel_forward.1} parent=1 // pred_fallthru
      _
    // Predicated region
    $region6: #{adapt_kernel_forward.1} parent=1 // pred_check
      _
    $region7: #{adapt_kernel_forward.1} parent=1 // pred_check_branch
      %18 = sbr.rel (0) target = $region9
    $region8: #{adapt_kernel_forward.1} parent=1 // pred_region
      _
    $region9: #{adapt_kernel_forward.1} parent=1 // pred_fallthru
      _
    // Predicated region
    $region10: #{adapt_kernel_forward.1} parent=1 // pred_check
      _
    $region11: #{adapt_kernel_forward.1} parent=1 // pred_check_branch
      %20 = sbr.rel (0) target = $region13
    $region12: #{adapt_kernel_forward.1} parent=1 // pred_region
      _
    $region13: #{adapt_kernel_forward.1} parent=1 // pred_fallthru
      _
    // Predicated region
    $region14: #{adapt_kernel_forward.1} parent=1 // pred_check
      _
    $region15: #{adapt_kernel_forward.1} parent=1 // pred_check_branch
      %22 = sbr.rel (0) target = $region17
    $region16: #{adapt_kernel_forward.1} parent=1 // pred_region
      _
    $region17: #{adapt_kernel_forward.1} parent=1 // pred_fallthru
      _
    // Predicated region
    $region18: #{adapt_kernel_forward.1} parent=1 // pred_check
      _
    $region19: #{adapt_kernel_forward.1} parent=1 // pred_check_branch
      %24 = sbr.rel (0) target = $region21
    $region20: #{adapt_kernel_forward.1} parent=1 // pred_region
      _
    $region21: #{adapt_kernel_forward.1} parent=1 // pred_fallthru
      _
    // Predicated region
    $region22: #{adapt_kernel_forward.1} parent=1 // pred_check
      _
    $region23: #{adapt_kernel_forward.1} parent=1 // pred_check_branch
      %26 = sbr.rel (0) target = $region25
    $region24: #{adapt_kernel_forward.1} parent=1 // pred_region
      _
    $region25: #{adapt_kernel_forward.1} parent=1 // pred_fallthru
      _
    // Predicated region
    $region26: #{adapt_kernel_forward.1} parent=1 // pred_check
      _
    $region27: #{adapt_kernel_forward.1} parent=1 // pred_check_branch
      %28 = sbr.rel (0) target = $region29
    $region28: #{adapt_kernel_forward.1} parent=1 // pred_region
      _
    $region29: #{adapt_kernel_forward.1} parent=1 // pred_fallthru
      _
    %v30 = vld [vmem:[%s0] sm:$0xff]
    %v31 = vpack.c.bf16 %v30, %v30
    %v32 = vld [vmem:[%s1] sm:$0xf]
    %v33 = vld [vmem:[%s2] sm:$0x1]
    %v35 = vlaneseq
    %v36 = vshrl.u32 %v35, 7
    %v37 = vsub.s32 0, %v36
    %v38 = vrot.slane %v33, %v37
    %vm40 = vcmask 56320
    %v42 = vsel %vm40, %v31, 0
    %vm44 = vcmask 1042432
    %vm45 = vcmask 1043456
    %v46 = vsel %vm44, 4294967295, 65535
    %v47 = vsel %vm45, %v46, 0
    %v49 = vand.u32 %v32, %v47
    %51 = vmatprep.subr.bf16.mxu0 0
    %52 = vmatpush1.bf16.msra.mxu0 %v49
    %53 = vmatprep.subr.bf16.mxu0 0
    %54 = vmatpush1.bf16.msra.mxu0 0
    %55 = vmatprep.subr.bf16.mxu0 0
    %56 = vmatpush1.bf16.msra.mxu0 0
    %57 = vmatprep.subr.bf16.mxu0 0
    %58 = vmatpush1.bf16.msra.mxu0 0
    %59 = vmatprep.subr.bf16.mxu0 0
    %60 = vmatpush1.bf16.msra.mxu0 0
    %61 = vmatprep.subr.bf16.mxu0 0
    %62 = vmatpush1.bf16.msra.mxu0 0
    %63 = vmatprep.subr.bf16.mxu0 0
    %64 = vmatpush1.bf16.msra.mxu0 0
    %65 = vmatprep.subr.bf16.mxu0 0
    %66 = vmatpush1.bf16.msra.mxu0 0
    %67 = vmatprep.subr.bf16.mxu0 0
    %68 = vmatpush1.bf16.msra.mxu0 0
    %69 = vmatprep.subr.bf16.mxu0 0
    %70 = vmatpush1.bf16.msra.mxu0 0
    %71 = vmatprep.subr.bf16.mxu0 0
    %72 = vmatpush1.bf16.msra.mxu0 0
    %73 = vmatprep.subr.bf16.mxu0 0
    %74 = vmatpush1.bf16.msra.mxu0 0
    %75 = vmatprep.subr.bf16.mxu0 0
    %76 = vmatpush1.bf16.msra.mxu0 0
    %77 = vmatprep.subr.bf16.mxu0 0
    %78 = vmatpush1.bf16.msra.mxu0 0
    %79 = vmatprep.subr.bf16.mxu0 0
    %80 = vmatpush1.bf16.msra.mxu0 0
    %81 = vmatprep.subr.bf16.mxu0 0
    %82 = vmatpush1.bf16.msra.mxu0 0
    %83 = vmatprep.mubr.bf16.mxu0 0
    %84 = vmatmul.mubr.bf16.gmra.mrb[0].mxu0 %v42
    %v85 = vpop.f32.mrb[0].mxu0
    %v86 = vadd.f32 %v38, %v85
    %v87 = vpop.f32.mrb[0].mxu0
    %v88 = vpop.f32.mrb[0].mxu0
    %v89 = vpop.f32.mrb[0].mxu0
    %90 = vdwg.mxu0
    %v91 = vmul.f32 %v86, 0.5
    %v92 = vmul.f32 %v86, 0.70710677
    %v93 = verf.f32.pop %v92
    %v94 = vadd.f32 %v93, 1.0
    %v95 = vmul.f32 %v91, %v94
    %v96 = vpack.c.bf16 %v95, %v95
    %v97 = vld [vmem:[%s3] sm:$0xf]
    %v98 = vld [vmem:[%s3 + $0x4] sm:$0xf]
    %v99 = vld [vmem:[%s3 + $0x8] sm:$0xf]
    %v100 = vld [vmem:[%s3 + $0xc] sm:$0xf]
    %v101 = vld [vmem:[%s3 + $0x10] sm:$0xf]
    %v102 = vld [vmem:[%s3 + $0x14] sm:$0xf]
    %v103 = vld [vmem:[%s3 + $0x18] sm:$0xf]
    %v104 = vld [vmem:[%s3 + $0x1c] sm:$0xf]
    %v105 = vld [vmem:[%s4] sm:$0x1]
    %v107 = vlaneseq
    %v108 = vshrl.u32 %v107, 7
    %v109 = vsub.s32 0, %v108
    %v110 = vrot.slane %v105, %v109
    %v120 = vunpack.c.l.b16 %v97
    %v121 = vunpack.c.l.b16 %v98
    %v122 = vunpack.c.l.b16 %v99
    %v123 = vunpack.c.l.b16 %v100
    %v124 = vunpack.c.l.b16 %v101
    %v125 = vunpack.c.l.b16 %v102
    %v126 = vunpack.c.l.b16 %v103
    %v127 = vunpack.c.l.b16 %v104
    %v128 = vpack.c.b16 %v121, %v120
    %v129 = vpack.c.b16 %v123, %v122
    %v130 = vpack.c.b16 %v125, %v124
    %v131 = vpack.c.b16 %v127, %v126
    %vm136 = vcmask 523264
    %v138 = vsel %vm136, %v96, 0
    %140 = vmatprep.subr.bf16.mxu0 0
    %141 = vmatpush1.bf16.msra.mxu0 %v128
    %142 = vmatprep.subr.bf16.mxu0 0
    %143 = vmatpush1.bf16.msra.mxu0 %v129
    %144 = vmatprep.subr.bf16.mxu0 0
    %145 = vmatpush1.bf16.msra.mxu0 %v130
    %146 = vmatprep.subr.bf16.mxu0 0
    %147 = vmatpush1.bf16.msra.mxu0 %v131
    %148 = vmatprep.subr.bf16.mxu0 0
    %149 = vmatpush1.bf16.msra.mxu0 0
    %150 = vmatprep.subr.bf16.mxu0 0
    %151 = vmatpush1.bf16.msra.mxu0 0
    %152 = vmatprep.subr.bf16.mxu0 0
    %153 = vmatpush1.bf16.msra.mxu0 0
    %154 = vmatprep.subr.bf16.mxu0 0
    %155 = vmatpush1.bf16.msra.mxu0 0
    %156 = vmatprep.subr.bf16.mxu0 0
    %157 = vmatpush1.bf16.msra.mxu0 0
    %158 = vmatprep.subr.bf16.mxu0 0
    %159 = vmatpush1.bf16.msra.mxu0 0
    %160 = vmatprep.subr.bf16.mxu0 0
    %161 = vmatpush1.bf16.msra.mxu0 0
    %162 = vmatprep.subr.bf16.mxu0 0
    %163 = vmatpush1.bf16.msra.mxu0 0
    %164 = vmatprep.subr.bf16.mxu0 0
    %165 = vmatpush1.bf16.msra.mxu0 0
    %166 = vmatprep.subr.bf16.mxu0 0
    %167 = vmatpush1.bf16.msra.mxu0 0
    %168 = vmatprep.subr.bf16.mxu0 0
    %169 = vmatpush1.bf16.msra.mxu0 0
    %170 = vmatprep.subr.bf16.mxu0 0
    %171 = vmatpush1.bf16.msra.mxu0 0
    %172 = vmatprep.mubr.bf16.mxu0 0
    %173 = vmatmul.mubr.bf16.gmra.mrb[0].mxu0 %v138
    %v174 = vpop.f32.mrb[0].mxu0
    %v175 = vadd.f32 %v110, %v174
    %v176 = vpop.f32.mrb[0].mxu0
    %v177 = vpop.f32.mrb[0].mxu0
    %v178 = vpop.f32.mrb[0].mxu0
    %179 = vdwg.mxu0
    %v180 = vmul.f32 %v175, 0.5
    %v181 = vmul.f32 %v175, 0.70710677
    %v182 = verf.f32.pop %v181
    %v183 = vadd.f32 %v182, 1.0
    %v184 = vmul.f32 %v180, %v183
    %v185 = vpack.c.bf16 %v184, %v184
    %v186 = vld [vmem:[%s5] sm:$0xff]
    %v187 = vld [vmem:[%s5 + $0x8] sm:$0xff]
    %v188 = vld [vmem:[%s5 + $0x10] sm:$0xff]
    %v189 = vld [vmem:[%s5 + $0x18] sm:$0xff]
    %v190 = vld [vmem:[%s5 + $0x20] sm:$0xff]
    %v191 = vld [vmem:[%s5 + $0x28] sm:$0xff]
    %v192 = vld [vmem:[%s5 + $0x30] sm:$0xff]
    %v193 = vld [vmem:[%s5 + $0x38] sm:$0xff]
    %v194 = vld [vmem:[%s5 + $0x40] sm:$0xff]
    %v195 = vld [vmem:[%s5 + $0x48] sm:$0xff]
    %v196 = vld [vmem:[%s5 + $0x50] sm:$0xff]
    %v197 = vld [vmem:[%s5 + $0x58] sm:$0xff]
    %v198 = vld [vmem:[%s5 + $0x60] sm:$0xff]
    %v199 = vld [vmem:[%s5 + $0x68] sm:$0xff]
    %v200 = vld [vmem:[%s5 + $0x70] sm:$0xff]
    %v201 = vld [vmem:[%s5 + $0x78] sm:$0xff]
    %v202 = vld [vmem:[%s5 + $0x80] sm:$0xff]
    %v203 = vld [vmem:[%s5 + $0x88] sm:$0xff]
    %v204 = vld [vmem:[%s5 + $0x90] sm:$0xff]
    %v205 = vld [vmem:[%s5 + $0x98] sm:$0xff]
    %v206 = vld [vmem:[%s5 + $0xa0] sm:$0xff]
    %v207 = vld [vmem:[%s5 + $0xa8] sm:$0xff]
    %v208 = vld [vmem:[%s5 + $0xb0] sm:$0xff]
    %v209 = vld [vmem:[%s5 + $0xb8] sm:$0xff]
    %v210 = vld [vmem:[%s5 + $0xc0] sm:$0xff]
    %v211 = vld [vmem:[%s5 + $0xc8] sm:$0xff]
    %v212 = vld [vmem:[%s5 + $0xd0] sm:$0xff]
    %v213 = vld [vmem:[%s5 + $0xd8] sm:$0xff]
    %v214 = vld [vmem:[%s5 + $0xe0] sm:$0xff]
    %v215 = vld [vmem:[%s5 + $0xe8] sm:$0xff]
    %v216 = vld [vmem:[%s5 + $0xf0] sm:$0xff]
    %v217 = vld [vmem:[%s5 + $0xf8] sm:$0xff]
    %v218 = vld [vmem:[%s6] sm:$0xf]
    %v220 = vlaneseq
    %v221 = vshrl.u32 %v220, 7
    %v222 = vsub.s32 0, %v221
    %v223 = vrot.slane %v218, %v222
    %v224 = vlaneseq
    %v225 = vshrl.u32 %v224, 7
    %v226 = vsub.s32 1, %v225
    %v227 = vrot.slane %v218, %v226
    %v228 = vlaneseq
    %v229 = vshrl.u32 %v228, 7
    %v230 = vsub.s32 2, %v229
    %v231 = vrot.slane %v218, %v230
    %v232 = vlaneseq
    %v233 = vshrl.u32 %v232, 7
    %v234 = vsub.s32 3, %v233
    %v235 = vrot.slane %v218, %v234
    %v272 = vunpack.c.l.b16 %v186
    %v273 = vunpack.c.h.b16 %v186
    %v274 = vunpack.c.l.b16 %v187
    %v275 = vunpack.c.h.b16 %v187
    %v276 = vunpack.c.l.b16 %v188
    %v277 = vunpack.c.h.b16 %v188
    %v278 = vunpack.c.l.b16 %v189
    %v279 = vunpack.c.h.b16 %v189
    %v280 = vunpack.c.l.b16 %v190
    %v281 = vunpack.c.h.b16 %v190
    %v282 = vunpack.c.l.b16 %v191
    %v283 = vunpack.c.h.b16 %v191
    %v284 = vunpack.c.l.b16 %v192
    %v285 = vunpack.c.h.b16 %v192
    %v286 = vunpack.c.l.b16 %v193
    %v287 = vunpack.c.h.b16 %v193
    %v288 = vunpack.c.l.b16 %v194
    %v289 = vunpack.c.h.b16 %v194
    %v290 = vunpack.c.l.b16 %v195
    %v291 = vunpack.c.h.b16 %v195
    %v292 = vunpack.c.l.b16 %v196
    %v293 = vunpack.c.h.b16 %v196
    %v294 = vunpack.c.l.b16 %v197
    %v295 = vunpack.c.h.b16 %v197
    %v296 = vunpack.c.l.b16 %v198
    %v297 = vunpack.c.h.b16 %v198
    %v298 = vunpack.c.l.b16 %v199
    %v299 = vunpack.c.h.b16 %v199
    %v300 = vunpack.c.l.b16 %v200
    %v301 = vunpack.c.h.b16 %v200
    %v302 = vunpack.c.l.b16 %v201
    %v303 = vunpack.c.h.b16 %v201
    %v304 = vunpack.c.l.b16 %v202
    %v305 = vunpack.c.h.b16 %v202
    %v306 = vunpack.c.l.b16 %v203
    %v307 = vunpack.c.h.b16 %v203
    %v308 = vunpack.c.l.b16 %v204
    %v309 = vunpack.c.h.b16 %v204
    %v310 = vunpack.c.l.b16 %v205
    %v311 = vunpack.c.h.b16 %v205
    %v312 = vunpack.c.l.b16 %v206
    %v313 = vunpack.c.h.b16 %v206
    %v314 = vunpack.c.l.b16 %v207
    %v315 = vunpack.c.h.b16 %v207
    %v316 = vunpack.c.l.b16 %v208
    %v317 = vunpack.c.h.b16 %v208
    %v318 = vunpack.c.l.b16 %v209
    %v319 = vunpack.c.h.b16 %v209
    %v320 = vunpack.c.l.b16 %v210
    %v321 = vunpack.c.h.b16 %v210
    %v322 = vunpack.c.l.b16 %v211
    %v323 = vunpack.c.h.b16 %v211
    %v324 = vunpack.c.l.b16 %v212
    %v325 = vunpack.c.h.b16 %v212
    %v326 = vunpack.c.l.b16 %v213
    %v327 = vunpack.c.h.b16 %v213
    %v328 = vunpack.c.l.b16 %v214
    %v329 = vunpack.c.h.b16 %v214
    %v330 = vunpack.c.l.b16 %v215
    %v331 = vunpack.c.h.b16 %v215
    %v332 = vunpack.c.l.b16 %v216
    %v333 = vunpack.c.h.b16 %v216
    %v334 = vunpack.c.l.b16 %v217
    %v335 = vunpack.c.h.b16 %v217
    %v336 = vpack.c.b16 %v276, %v272
    %v337 = vpack.c.b16 %v277, %v273
    %v338 = vpack.c.b16 %v278, %v274
    %v339 = vpack.c.b16 %v279, %v275
    %v340 = vpack.c.b16 %v284, %v280
    %v341 = vpack.c.b16 %v285, %v281
    %v342 = vpack.c.b16 %v286, %v282
    %v343 = vpack.c.b16 %v287, %v283
    %v344 = vpack.c.b16 %v292, %v288
    %v345 = vpack.c.b16 %v293, %v289
    %v346 = vpack.c.b16 %v294, %v290
    %v347 = vpack.c.b16 %v295, %v291
    %v348 = vpack.c.b16 %v300, %v296
    %v349 = vpack.c.b16 %v301, %v297
    %v350 = vpack.c.b16 %v302, %v298
    %v351 = vpack.c.b16 %v303, %v299
    %v352 = vpack.c.b16 %v308, %v304
    %v353 = vpack.c.b16 %v309, %v305
    %v354 = vpack.c.b16 %v310, %v306
    %v355 = vpack.c.b16 %v311, %v307
    %v356 = vpack.c.b16 %v316, %v312
    %v357 = vpack.c.b16 %v317, %v313
    %v358 = vpack.c.b16 %v318, %v314
    %v359 = vpack.c.b16 %v319, %v315
    %v360 = vpack.c.b16 %v324, %v320
    %v361 = vpack.c.b16 %v325, %v321
    %v362 = vpack.c.b16 %v326, %v322
    %v363 = vpack.c.b16 %v327, %v323
    %v364 = vpack.c.b16 %v332, %v328
    %v365 = vpack.c.b16 %v333, %v329
    %v366 = vpack.c.b16 %v334, %v330
    %v367 = vpack.c.b16 %v335, %v331
    %400 = vmatprep.subr.bf16.mxu0 %v337
    %401 = vmatpush1.bf16.msra.mxu0 %v336
    %402 = vmatprep.subr.bf16.mxu0 %v341
    %403 = vmatpush1.bf16.msra.mxu0 %v340
    %404 = vmatprep.subr.bf16.mxu0 %v345
    %405 = vmatpush1.bf16.msra.mxu0 %v344
    %406 = vmatprep.subr.bf16.mxu0 %v349
    %407 = vmatpush1.bf16.msra.mxu0 %v348
    %408 = vmatprep.subr.bf16.mxu0 %v353
    %409 = vmatpush1.bf16.msra.mxu0 %v352
    %410 = vmatprep.subr.bf16.mxu0 %v357
    %411 = vmatpush1.bf16.msra.mxu0 %v356
    %412 = vmatprep.subr.bf16.mxu0 %v361
    %413 = vmatpush1.bf16.msra.mxu0 %v360
    %414 = vmatprep.subr.bf16.mxu0 %v365
    %415 = vmatpush1.bf16.msra.mxu0 %v364
    %416 = vmatprep.subr.bf16.mxu0 0
    %417 = vmatpush1.bf16.msra.mxu0 0
    %418 = vmatprep.subr.bf16.mxu0 0
    %419 = vmatpush1.bf16.msra.mxu0 0
    %420 = vmatprep.subr.bf16.mxu0 0
    %421 = vmatpush1.bf16.msra.mxu0 0
    %422 = vmatprep.subr.bf16.mxu0 0
    %423 = vmatpush1.bf16.msra.mxu0 0
    %424 = vmatprep.subr.bf16.mxu0 0
    %425 = vmatpush1.bf16.msra.mxu0 0
    %426 = vmatprep.subr.bf16.mxu0 0
    %427 = vmatpush1.bf16.msra.mxu0 0
    %428 = vmatprep.subr.bf16.mxu0 0
    %429 = vmatpush1.bf16.msra.mxu0 0
    %430 = vmatprep.subr.bf16.mxu0 0
    %431 = vmatpush1.bf16.msra.mxu0 0
    %432 = vmatprep.mubr.bf16.mxu0 0
    %433 = vmatmul.mubr.bf16.gmra.mrb[0].mxu0 %v185
    %v434 = vpop.f32.mrb[0].mxu0
    %v435 = vadd.f32 %v223, %v434
    %v436 = vpop.f32.mrb[0].mxu0
    %v437 = vadd.f32 %v227, %v436
    %v438 = vpop.f32.mrb[0].mxu0
    %v439 = vpop.f32.mrb[0].mxu0
    %440 = vdwg.mxu0
    %441 = vmatprep.subr.bf16.mxu0 %v339
    %442 = vmatpush1.bf16.msra.mxu0 %v338
    %443 = vmatprep.subr.bf16.mxu0 %v343
    %444 = vmatpush1.bf16.msra.mxu0 %v342
    %445 = vmatprep.subr.bf16.mxu0 %v347
    %446 = vmatpush1.bf16.msra.mxu0 %v346
    %447 = vmatprep.subr.bf16.mxu0 %v351
    %448 = vmatpush1.bf16.msra.mxu0 %v350
    %449 = vmatprep.subr.bf16.mxu0 %v355
    %450 = vmatpush1.bf16.msra.mxu0 %v354
    %451 = vmatprep.subr.bf16.mxu0 %v359
    %452 = vmatpush1.bf16.msra.mxu0 %v358
    %453 = vmatprep.subr.bf16.mxu0 %v363
    %454 = vmatpush1.bf16.msra.mxu0 %v362
    %455 = vmatprep.subr.bf16.mxu0 %v367
    %456 = vmatpush1.bf16.msra.mxu0 %v366
    %457 = vmatprep.subr.bf16.mxu0 0
    %458 = vmatpush1.bf16.msra.mxu0 0
    %459 = vmatprep.subr.bf16.mxu0 0
    %460 = vmatpush1.bf16.msra.mxu0 0
    %461 = vmatprep.subr.bf16.mxu0 0
    %462 = vmatpush1.bf16.msra.mxu0 0
    %463 = vmatprep.subr.bf16.mxu0 0
    %464 = vmatpush1.bf16.msra.mxu0 0
    %465 = vmatprep.subr.bf16.mxu0 0
    %466 = vmatpush1.bf16.msra.mxu0 0
    %467 = vmatprep.subr.bf16.mxu0 0
    %468 = vmatpush1.bf16.msra.mxu0 0
    %469 = vmatprep.subr.bf16.mxu0 0
    %470 = vmatpush1.bf16.msra.mxu0 0
    %471 = vmatprep.subr.bf16.mxu0 0
    %472 = vmatpush1.bf16.msra.mxu0 0
    %473 = vmatprep.mubr.bf16.mxu0 0
    %474 = vmatmul.mubr.bf16.gmra.mrb[0].mxu0 %v185
    %v475 = vpop.f32.mrb[0].mxu0
    %v476 = vadd.f32 %v231, %v475
    %v477 = vpop.f32.mrb[0].mxu0
    %v478 = vadd.f32 %v235, %v477
    %v479 = vpop.f32.mrb[0].mxu0
    %v480 = vpop.f32.mrb[0].mxu0
    %481 = vdwg.mxu0
    %482 = vst [vmem:[%s7] sm:$0xff] %v435
    %483 = vst [vmem:[%s7 + $0x8] sm:$0xff] %v437
    %vm484 = vcmask 850944
    %485 = vst.msk [vmem:[%s7 + $0x10] sm:$0xff] %vm484, %v476
    %vm486 = vcmask 48128
    %487 = vst.msk [vmem:[#allocation2] sm:$0xff] %vm486, %v478
    // Predicated region
    $region30: #{adapt_kernel_forward.1} parent=1 // pred_check
      _
    $region31: #{adapt_kernel_forward.1} parent=1 // pred_check_branch
      %489 = sbr.rel (0) target = $region33
    $region32: #{adapt_kernel_forward.1} parent=1 // pred_region
      _
    $region33: #{adapt_kernel_forward.1} parent=1 // pred_fallthru
      _
    // Predicated region
    $region34: #{adapt_kernel_forward.1} parent=1 // pred_check
      _
    $region35: #{adapt_kernel_forward.1} parent=1 // pred_check_branch
      %491 = sbr.rel (0) target = $region37
    $region36: #{adapt_kernel_forward.1} parent=1 // pred_region
      %s493 = ssub.s32 128, 128
      %494 = vsyncadd [#allocation3], %s493
      %s496 = sshll.u32 [#allocation2], 4
      %s497 = int_to_ptr.vmem [resolvable:$true] %s496
      %499 = dma.vmem_to_hbm [thread:$0]  %s497, 128, %s8, [#allocation3]
    $region37: #{adapt_kernel_forward.1} parent=1 // pred_fallthru
      _
    // Predicated region
    $region38: #{adapt_kernel_forward.1} parent=1 // pred_check
      _
    $region39: #{adapt_kernel_forward.1} parent=1 // pred_check_branch
      %501 = sbr.rel (0) target = $region41
    $region40: #{adapt_kernel_forward.1} parent=1 // pred_region
      _
    $region41: #{adapt_kernel_forward.1} parent=1 // pred_fallthru
      _
    // Predicated region
    $region42: #{adapt_kernel_forward.1} parent=1 // pred_check
      _
    $region43: #{adapt_kernel_forward.1} parent=1 // pred_check_branch
      %503 = sbr.rel (0) target = $region45
    $region44: #{adapt_kernel_forward.1} parent=1 // pred_region
      %504 = dma.done [#allocation3], 128
    $region45: #{adapt_kernel_forward.1} parent=1 // pred_fallthru
      _
    %505 = vsyncpa [#allocation3], 1

</llo_original>
